<compile_context>
chip_gen: v5e
topology: v5e:2x2
jax: 0.10.0
libtpu: 0.0.40
codegen_flags: <defaults>
</compile_context>

<pallas_src>
import jax
import jax.numpy as jnp
from jax.experimental import pallas as pl
from jax.experimental.pallas import tpu as pltpu

KERNEL_SIZE = 7
MAX_SIGMA = 1.0

# Caps the per-step sublane extent B*H: bounds the block-diagonal vertical
# Toeplitz (quadratic in B*H) and keeps the kernel HBM-bound at fp32 precision.
_MAX_SUBLANE_ROWS = 256


def make_gaussian_1d(kernel_size: int, sigma: float) -> jnp.ndarray:
    """1-D Gaussian factor. outer(g, g) equals GaussianBlur.random_kernel()'s
    normalized 2-D kernel (the 2-D Gaussian is exactly separable)."""
    mean = (kernel_size - 1) / 2.0
    coords = jnp.arange(kernel_size, dtype=jnp.float32)
    g = jnp.exp(-((coords - mean) ** 2) / (2.0 * (sigma ** 2)))
    return (g / jnp.sum(g)).astype(jnp.float32)


def banded_toeplitz(w1d: jnp.ndarray, n: int) -> jnp.ndarray:
    """(n, n) matrix T with T[i, j] = w1d[i - j + pad] inside the band, 0 outside.
    v @ T == 1-D cross-correlation of v with w1d under zero padding."""
    k = w1d.shape[0]
    pad = k // 2
    i = jnp.arange(n)[:, None]
    j = jnp.arange(n)[None, :]
    d = i - j + pad
    valid = (d >= 0) & (d < k)
    return jnp.where(valid, w1d[jnp.clip(d, 0, k - 1)], 0.0).astype(jnp.float32)


def _blur_kernel(tv_ref, th_ref, x_ref, o_ref):
    # tv_ref: VMEM (B*H, B*H) block-diagonal vertical Toeplitz (f32)
    # th_ref: VMEM (Wp, Wp)   block-diagonal horizontal Toeplitz (f32)
    # x_ref:  VMEM (B, H, Wp) unpadded, lane-packed input planes
    # o_ref:  VMEM (B, H, Wp) output planes
    B, H, Wp = x_ref.shape

    # Hoisted load + dtype conversion, once per grid step.
    x = x_ref[...].astype(jnp.float32).reshape(B * H, Wp)

    # Vertical pass: single matmul against the block-diagonal (B*H, B*H) banded
    # Toeplitz. The zero-pad H boundary and the isolation between the B planes
    # live inside the band, so no host-side padding and no sublane shifts.
    v = jnp.dot(tv_ref[...], x,
                preferred_element_type=jnp.float32,
                precision=jax.lax.Precision.HIGHEST)

    # Horizontal pass: single tall weight-stationary matmul against the
    # block-diagonal (Wp, Wp) Toeplitz (g lane-packed planes per block; the
    # zero-pad W boundary is encoded in the band).
    y = jnp.dot(v, th_ref[...],
                preferred_element_type=jnp.float32,
                precision=jax.lax.Precision.HIGHEST)

    o_ref[...] = y.reshape(B, H, Wp).astype(o_ref.dtype)


def _vmem_capacity_bytes() -> int:
    """Physical VMEM of the current generation (fallback: v7x's 64 MiB)."""
    try:
        cap = int(getattr(pltpu.get_tpu_info(), "vmem_capacity_bytes", 0))
        if cap > 0:
            return cap
    except Exception:
        pass
    return 64 * 1024 * 1024


def _choose_lane_pack(nc: int, w: int) -> int:
    """Largest divisor g of nc with g*w <= 128 lanes, preferring to leave >= 2
    packed planes so the grid has >= 2 steps (megacore / pipelining)."""
    max_g = max(1, 128 // w) if w <= 128 else 1
    divs = [d for d in range(1, nc + 1) if nc % d == 0 and d <= max_g]
    pref = [d for d in divs if nc // d >= 2]
    return max(pref) if pref else max(divs)


def _choose_plane_batch(p: int, h: int, wp: int, itemsize: int,
                        budget_bytes: int) -> int:
    """Largest divisor B of `p` packed planes per grid step such that the
    per-step working set fits the budget, the sublane extent B*H stays bounded,
    and (when possible) the grid keeps >= 2 steps."""
    best = 1
    for b in range(1, p + 1):
        if p % b:
            continue
        if p >= 2 and p // b < 2:          # keep >= 2 grid steps
            continue
        if b * h > _MAX_SUBLANE_ROWS:      # bound block-diag T_v / stay mem-bound
            continue
        blk = b * h * wp
        per_step = (2 * blk * itemsize       # double-buffered input block
                    + 2 * blk * itemsize     # double-buffered output block
                    + 2 * blk * 4            # f32 working copy + intermediate
                    + (b * h) ** 2 * 4       # block-diag vertical Toeplitz
                    + wp * wp * 4)           # block-diag horizontal Toeplitz
        if per_step <= budget_bytes:
            best = b
    return best


def gaussian_blur(x: jnp.ndarray, w1d: jnp.ndarray) -> jnp.ndarray:
    """Depthwise (groups=C) 2-D Gaussian blur, padding=K//2, stride=1.

    x: (N, C, H, W); w1d: (K,) 1-D Gaussian factor shared by all channels.
    """
    N, C, H, W = x.shape
    NC = N * C

    # ---- lane packing (wrapper-side layout plumbing, only when W < 128) ----
    g = _choose_lane_pack(NC, W)
    P = NC // g
    Wp = g * W

    x_flat = x.reshape(NC, H, W)
    if g > 1:
        # g planes side by side on the lane axis: (P, g, H, W) -> (P, H, g*W).
        x_packed = (x_flat.reshape(P, g, H, W)
                    .transpose(0, 2, 1, 3)
                    .reshape(P, H, Wp))
    else:
        x_packed = x_flat

    # ---- generation-aware VMEM budgeting ----
    capacity = _vmem_capacity_bytes()            # 64 MiB (v7x) / 128 MiB (v5e/v6e)
    block_budget = (capacity * 3) // 10          # ~19 MiB on v7x, ~38 MiB on v5e/v6e
    vmem_limit = capacity // 2                   # 32 MiB on v7x, 64 MiB on v5e/v6e
    B = _choose_plane_batch(P, H, Wp, x.dtype.itemsize, block_budget)

    # ---- Toeplitz operands (zero padding + plane isolation inside the bands) --
    t_h = jnp.kron(jnp.eye(g, dtype=jnp.float32),
                   banded_toeplitz(w1d, W))           # (Wp, Wp)
    t_v = jnp.kron(jnp.eye(B, dtype=jnp.float32),
                   banded_toeplitz(w1d, H).T)         # (B*H, B*H)

    # TODO(synk): for large images, tile H into fixed chunks with a K//2-row
    # halo (pl.ds / element-offset index_map) and switch the vertical pass to
    # per-chunk shifted taps so the block-diagonal T_v does not grow with B,
    # and so a single plane can never exceed the VMEM block budget.
    # TODO(synk): if xprof shows exposed input DMA, add
    # pipeline_mode=pl.Buffered(3) to the input BlockSpec below.
    grid = (P // B,)

    out_packed = pl.pallas_call(
        _blur_kernel,
        out_shape=jax.ShapeDtypeStruct((P, H, Wp), x.dtype),
        grid=grid,
        in_specs=[
            pl.BlockSpec((B * H, B * H), lambda i: (0, 0)),   # vertical Toeplitz
            pl.BlockSpec((Wp, Wp), lambda i: (0, 0)),         # horizontal Toeplitz
            pl.BlockSpec((B, H, Wp), lambda i: (i, 0, 0)),    # unpadded planes
        ],
        out_specs=pl.BlockSpec((B, H, Wp), lambda i: (i, 0, 0)),
        compiler_params=pltpu.CompilerParams(
            dimension_semantics=("parallel",),
            vmem_limit_bytes=vmem_limit,
        ),
    )(t_v, t_h, x_packed)

    # ---- unpack lanes back to (N, C, H, W) ----
    if g > 1:
        out = (out_packed.reshape(P, H, g, W)
               .transpose(0, 2, 1, 3)
               .reshape(NC, H, W))
    else:
        out = out_packed
    return out.reshape(N, C, H, W)


if __name__ == "__main__":
    key = jax.random.PRNGKey(0)
    key_x, key_sigma = jax.random.split(key)

    # Input must have 3 channels (groups=3 in the PyTorch module).
    N, C, H, W = 2, 3, 16, 16
    x = jax.random.normal(key_x, (N, C, H, W), dtype=jnp.float32)

    # Deterministic stand-in for random.random() * max_sigma + 0.01
    sigma = float(jax.random.uniform(key_sigma, ())) * MAX_SIGMA + 0.01
    w1d = make_gaussian_1d(KERNEL_SIZE, sigma)

    y = gaussian_blur(x, w1d)
    jax.block_until_ready(y)

    # Reference check: plain-JAX depthwise conv with the identical 2-D kernel
    # (outer(w1d, w1d) == the module's normalized 2-D Gaussian).
    w2d = jnp.outer(w1d, w1d)
    w_conv = jnp.broadcast_to(w2d[None, None], (C, 1, KERNEL_SIZE, KERNEL_SIZE))
    y_ref = jax.lax.conv_general_dilated(
        x, w_conv,
        window_strides=(1, 1),
        padding=[(KERNEL_SIZE // 2, KERNEL_SIZE // 2)] * 2,
        dimension_numbers=("NCHW", "OIHW", "NCHW"),
        feature_group_count=C,
        precision=jax.lax.Precision.HIGHEST,
    )
    err = float(jnp.max(jnp.abs(y - y_ref)))
    assert jnp.allclose(y, y_ref, atol=1e-4, rtol=1e-4), err

    print("KERNEL_OK")
</pallas_src>

<mosaic_0001>
module attributes {stable_mosaic.version = 11 : i64} {
  func.func @_blur_kernel(%arg0: i32, %arg1: memref<16x16xf32, #tpu.memory_space<vmem>>, %arg2: memref<48x48xf32, #tpu.memory_space<vmem>>, %arg3: memref<1x16x48xf32, #tpu.memory_space<vmem>>, %arg4: memref<1x16x48xf32, #tpu.memory_space<vmem>>) attributes {dimension_semantics = [#tpu.dimension_semantics<parallel>], iteration_bounds = array<i64: 2>, scalar_prefetch = 0 : i64, scratch_operands = 0 : i64, tpu.core_type = #tpu.core_type<tc>, window_params = [{pipeline_mode = #tpu.pipeline_mode<synchronous>, transform_indices = @transform_0, window_bounds = array<i64: 16, 16>}, {pipeline_mode = #tpu.pipeline_mode<synchronous>, transform_indices = @transform_1, window_bounds = array<i64: 48, 48>}, {transform_indices = @transform_2, window_bounds = array<i64: 1, 16, 48>}, {transform_indices = @transform_3, window_bounds = array<i64: 1, 16, 48>}]} {
    %c0 = arith.constant 0 : index
    %c0_0 = arith.constant 0 : index
    %c0_1 = arith.constant 0 : index
    %0 = vector.load %arg3[%c0, %c0_0, %c0_1] : memref<1x16x48xf32, #tpu.memory_space<vmem>>, vector<1x16x48xf32>
    %1 = vector.shape_cast %0 : vector<1x16x48xf32> to vector<16x48xf32>
    %c0_2 = arith.constant 0 : index
    %c0_3 = arith.constant 0 : index
    %2 = vector.load %arg1[%c0_2, %c0_3] : memref<16x16xf32, #tpu.memory_space<vmem>>, vector<16x16xf32>
    %cst = arith.constant dense<0.000000e+00> : vector<16x48xf32>
    %3 = tpu.matmul %2, %1, %cst {dimension_numbers = #tpu.dot_dimension_numbers<[1], [0], [0], [1], [0, 0, 1, 1], [], []>, precision = #tpu.contract_precision<fp32>} : vector<16x16xf32>, vector<16x48xf32>, vector<16x48xf32> -> vector<16x48xf32>
    %c0_4 = arith.constant 0 : index
    %c0_5 = arith.constant 0 : index
    %4 = vector.load %arg2[%c0_4, %c0_5] : memref<48x48xf32, #tpu.memory_space<vmem>>, vector<48x48xf32>
    %cst_6 = arith.constant dense<0.000000e+00> : vector<16x48xf32>
    %5 = tpu.matmul %3, %4, %cst_6 {dimension_numbers = #tpu.dot_dimension_numbers<[1], [0], [0], [1], [0, 0, 1, 1], [], []>, precision = #tpu.contract_precision<fp32>} : vector<16x48xf32>, vector<48x48xf32>, vector<16x48xf32> -> vector<16x48xf32>
    %6 = vector.shape_cast %5 : vector<16x48xf32> to vector<1x16x48xf32>
    %c0_7 = arith.constant 0 : index
    %c0_8 = arith.constant 0 : index
    %c0_9 = arith.constant 0 : index
    %7 = vector.load %arg4[%c0_7, %c0_8, %c0_9] : memref<1x16x48xf32, #tpu.memory_space<vmem>>, vector<1x16x48xf32>
    tpu.vector_store %arg4[%c0_7, %c0_8, %c0_9], %6 {strides = array<i32>} : memref<1x16x48xf32, #tpu.memory_space<vmem>>, vector<1x16x48xf32>,
    return
  }
  func.func @transform_0(%arg0: i32) -> (i32, i32) {
    %c0_i32 = arith.constant 0 : i32
    %c0_i32_0 = arith.constant 0 : i32
    %c0_i32_1 = arith.constant 0 : i32
    return %c0_i32, %c0_i32_0 : i32, i32
  }
  func.func @transform_1(%arg0: i32) -> (i32, i32) {
    %c0_i32 = arith.constant 0 : i32
    %c0_i32_0 = arith.constant 0 : i32
    %c0_i32_1 = arith.constant 0 : i32
    return %c0_i32, %c0_i32_0 : i32, i32
  }
  func.func @transform_2(%arg0: i32) -> (i32, i32, i32) {
    %c0_i32 = arith.constant 0 : i32
    %c0_i32_0 = arith.constant 0 : i32
    %c0_i32_1 = arith.constant 0 : i32
    return %arg0, %c0_i32, %c0_i32_0 : i32, i32, i32
  }
  func.func @transform_3(%arg0: i32) -> (i32, i32, i32) {
    %c0_i32 = arith.constant 0 : i32
    %c0_i32_0 = arith.constant 0 : i32
    %c0_i32_1 = arith.constant 0 : i32
    return %arg0, %c0_i32, %c0_i32_0 : i32, i32, i32
  }
}

</mosaic_0001>

<llo_original>
// kernel: tpu_custom_call.1
$region0: #{tpu_custom_call.1}
  #allocation0 [shape = 'u32[]', space=smem, size = 0x4, offset = 0x4, fixed_abs, tag = 'smem constant byte address 0x4 - core index']
  #allocation1 [shape = 'u32[72,128]{1,0:T(1,128)}', space=vmem, size = 0x9000, scoped, tag = 'internal scratch']
  %s0 = inlined_call_operand.hbm [shape: f32[16,16], index: 0, kind: input, shape index: {}]
  %s1 = inlined_call_operand.hbm [shape: f32[48,48], index: 1, kind: input, shape index: {}]
  %s2 = inlined_call_operand.hbm [shape: f32[2,16,48], index: 2, kind: input, shape index: {}]
  %s3 = inlined_call_operand.hbm [shape: f32[2,16,48], index: 3, kind: output, shape index: {}]
  %s4 = sld [smem:[#allocation0]]
  $region57: #{tpu_custom_call.1} parent=0
    _
  %s6 = ssub.s32 1, %s4
  %s7 = scalar_select 0, %s6, %s4
  $region1: #{tpu_custom_call.1} parent=0
    #allocation2 [shape = 'u8[8192]{0}', space=vmem, size = 0x2000, scoped, tag = 'input window, operand 0, single buffered']
    #allocation3 [shape = 's32[2]{0}', space=sflag, size = 0x8, scoped, tag = 'scoped memory for tpu_custom_call.1']
    #allocation4 [shape = 's32[2]{0}', space=sflag, size = 0x8, scoped, tag = 'scoped memory for tpu_custom_call.1']
    #allocation5 [shape = 'u8[24576]{0}', space=vmem, size = 0x6000, scoped, tag = 'input window, operand 1, single buffered']
    #allocation6 [shape = 's32[1]{0}', space=sflag, size = 0x4, scoped, tag = 'scoped memory for tpu_custom_call.1']
    #allocation7 [shape = 'u8[16384]{0}', space=vmem, size = 0x4000, scoped, tag = 'input window, operand 2']
    #allocation8 [shape = 'u8[16384]{0}', space=vmem, size = 0x4000, scoped, tag = 'output window, operand 0']
    %8 = vsyncpa [#allocation3], 0
    %9 = vsyncpa [#allocation6], 0
    %10 = vsyncpa [#allocation4], 0
    %s11 = scalar_lea.sflag [#allocation4], 1
    %12 = vsyncpa %s11, 0
    loop: start=0, step=1, limit=4
    $region2: #{tpu_custom_call.1} parent=1 // loop_pre_header
      _
    $region3: #{tpu_custom_call.1} parent=1 // loop_header
      %s14 = sphi 0, %s18
      %p15 = scmp.ge.s32.totalorder %s14, 4
      %s22 = sphi 0, %s22
      %s24 = sphi 0, %s22
      %s25 = sphi 0, %s24
      %s39 = sphi 0, %s25
      %s43 = sphi 0, %s43
      %s45 = sphi 0, %s43
      %s46 = sphi 0, %s45
      %s60 = sphi 0, %s46
      %s66 = sphi 0, %s68
      %s69 = sphi 0, %s66
      %s70 = sphi 0, %s69
      %s86 = sphi 0, %s70
      %s92 = sphi 0, %s94
      %s95 = sphi 0, %s92
      %s96 = sphi 0, %s95
      %s112 = sphi 0, %s96
    $region4: #{tpu_custom_call.1} parent=1 // loop_header_branch
      %17 = sbr.rel (%p15) target = $region8
    $region5: #{tpu_custom_call.1} parent=1 // loop_body
      %s19 = ssub.s32 %s14, 1
      %s20 = ssub.s32 %s14, 2
      %s21 = sadd.s32 %s14, 1
      %s23 = sadd.s32 %s22, 1
      %p26 = scmp.eq.s32.totalorder %s14, 1
      %p27 = scmp.ne.s32.totalorder %s22, %s24
      %p28 = scmp.eq.s32.totalorder %s14, 0
      %p29 = por %p27, %p28
      %p30 = scmp.ne.s32.totalorder %s22, %s24
      %p31 = scmp.eq.s32.totalorder %s19, 1
      %p32 = por %p30, %p31
      %p33 = scmp.ne.s32.totalorder %s24, %s25
      %p34 = scmp.eq.s32.totalorder %s19, 0
      %p35 = por %p33, %p34
      %p36 = scmp.ne.s32.totalorder %s24, %s25
      %p37 = scmp.eq.s32.totalorder %s20, 1
      %p38 = por %p36, %p37
      %p40 = scmp.ne.s32.totalorder %s25, %s39
      %p41 = scmp.eq.s32.totalorder %s20, 0
      %p42 = por %p40, %p41
      %s44 = sadd.s32 %s43, 1
      %p47 = scmp.eq.s32.totalorder %s14, 1
      %p48 = scmp.ne.s32.totalorder %s43, %s45
      %p49 = scmp.eq.s32.totalorder %s14, 0
      %p50 = por %p48, %p49
      %p51 = scmp.ne.s32.totalorder %s43, %s45
      %p52 = scmp.eq.s32.totalorder %s19, 1
      %p53 = por %p51, %p52
      %p54 = scmp.ne.s32.totalorder %s45, %s46
      %p55 = scmp.eq.s32.totalorder %s19, 0
      %p56 = por %p54, %p55
      %p57 = scmp.ne.s32.totalorder %s45, %s46
      %p58 = scmp.eq.s32.totalorder %s20, 1
      %p59 = por %p57, %p58
      %p61 = scmp.ne.s32.totalorder %s46, %s60
      %p62 = scmp.eq.s32.totalorder %s20, 0
      %p63 = por %p61, %p62
      %s64 = ssub.s32 %s14, %s21
      %p65 = scmp.eq.s32.totalorder %s64, 0
      %s67 = sadd.s32 %s66, 1
      %s68 = scalar_select %p65, %s66, %s67
      %p71 = pneg %p65
      %p72 = scmp.eq.s32.totalorder %s14, 1
      %p73 = por %p71, %p72
      %p74 = scmp.ne.s32.totalorder %s66, %s69
      %p75 = scmp.eq.s32.totalorder %s14, 0
      %p76 = por %p74, %p75
      %p77 = scmp.ne.s32.totalorder %s66, %s69
      %p78 = scmp.eq.s32.totalorder %s19, 1
      %p79 = por %p77, %p78
      %p80 = scmp.ne.s32.totalorder %s69, %s70
      %p81 = scmp.eq.s32.totalorder %s19, 0
      %p82 = por %p80, %p81
      %p83 = scmp.ne.s32.totalorder %s69, %s70
      %p84 = scmp.eq.s32.totalorder %s20, 1
      %p85 = por %p83, %p84
      %p87 = scmp.ne.s32.totalorder %s70, %s86
      %p88 = scmp.eq.s32.totalorder %s20, 0
      %p89 = por %p87, %p88
      %s90 = ssub.s32 %s14, %s21
      %p91 = scmp.eq.s32.totalorder %s90, 0
      %s93 = sadd.s32 %s92, 1
      %s94 = scalar_select %p91, %s92, %s93
      %p97 = pneg %p91
      %p98 = scmp.eq.s32.totalorder %s14, 1
      %p99 = por %p97, %p98
      %p100 = scmp.ne.s32.totalorder %s92, %s95
      %p101 = scmp.eq.s32.totalorder %s14, 0
      %p102 = por %p100, %p101
      %p103 = scmp.ne.s32.totalorder %s92, %s95
      %p104 = scmp.eq.s32.totalorder %s19, 1
      %p105 = por %p103, %p104
      %p106 = scmp.ne.s32.totalorder %s95, %s96
      %p107 = scmp.eq.s32.totalorder %s19, 0
      %p108 = por %p106, %p107
      %p109 = scmp.ne.s32.totalorder %s95, %s96
      %p110 = scmp.eq.s32.totalorder %s20, 1
      %p111 = por %p109, %p110
      %p113 = scmp.ne.s32.totalorder %s96, %s112
      %p114 = scmp.eq.s32.totalorder %s20, 0
      %p115 = por %p113, %p114
      %p116 = scmp.le.s32.totalorder 1, %s14
      %p117 = scmp.lt.s32.totalorder %s14, 3
      %p118 = pnand %p116, %p117
      %p119 = pneg %p118
      // Predicated region
      $region9: #{tpu_custom_call.1} parent=5 // pred_check
        _
      $region10: #{tpu_custom_call.1} parent=5 // pred_check_branch
        %121 = sbr.rel (%p118) target = $region12
      $region11: #{tpu_custom_call.1} parent=5 // pred_region
        %s122 = ssub.s32 %s14, 1
        // Predicated region
        $region13: #{tpu_custom_call.1} parent=11 // pred_check
          %p123 = pneg %p35
        $region14: #{tpu_custom_call.1} parent=11 // pred_check_branch
          %125 = sbr.rel (%p123) target = $region16
        $region15: #{tpu_custom_call.1} parent=11 // pred_region
          %127 = vsyncadd [#allocation3], 0
          %s128 = sshll.u32 %s0, 4
          %s129 = int_to_ptr.hbm [resolvable:$true] %s128
          %s130 = sshll.u32 [#allocation2], 4
          %s131 = int_to_ptr.vmem [resolvable:$true] %s130
          %136 = dma.hbm_to_vmem [thread:$0]  %s129, 256, %s131, [#allocation3], 128, 128, 8
        $region16: #{tpu_custom_call.1} parent=11 // pred_fallthru
          _
        // Predicated region
        $region17: #{tpu_custom_call.1} parent=11 // pred_check
          %p137 = pneg %p56
        $region18: #{tpu_custom_call.1} parent=11 // pred_check_branch
          %139 = sbr.rel (%p137) target = $region20
        $region19: #{tpu_custom_call.1} parent=11 // pred_region
          %141 = vsyncadd [#allocation6], 0
          %s142 = sshll.u32 %s1, 4
          %s143 = int_to_ptr.hbm [resolvable:$true] %s142
          %s144 = sshll.u32 [#allocation5], 4
          %s145 = int_to_ptr.vmem [resolvable:$true] %s144
          %150 = dma.hbm_to_vmem [thread:$0]  %s143, 768, %s145, [#allocation6], 128, 128, 8
        $region20: #{tpu_custom_call.1} parent=11 // pred_fallthru
          _
      $region12: #{tpu_custom_call.1} parent=5 // pred_fallthru
        _
      %p151 = scmp.lt.s32.totalorder %s14, 2
      // Predicated region
      $region21: #{tpu_custom_call.1} parent=5 // pred_check
        %p152 = pneg %p151
      $region22: #{tpu_custom_call.1} parent=5 // pred_check_branch
        %154 = sbr.rel (%p152) target = $region24
      $region23: #{tpu_custom_call.1} parent=5 // pred_region
        // Predicated region
        $region25: #{tpu_custom_call.1} parent=23 // pred_check
          %p155 = pneg %p76
        $region26: #{tpu_custom_call.1} parent=23 // pred_check_branch
          %157 = sbr.rel (%p155) target = $region28
        $region27: #{tpu_custom_call.1} parent=23 // pred_region
          %s158 = sand.u32 %s14, 1
          %s159 = scalar_lea.sflag [#allocation3], %s158
          %s160 = sand.u32 %s66, 1
          %s161 = smul.addr %s160, 16
          %s162 = scalar_lea.vmem [#allocation7], %s161
          %164 = vsyncadd %s159, 0
          %s165 = smul.addr %s14, 2
          %s166 = smul.addr %s165, 8
          %s167 = scalar_lea.hbm %s2, %s166
          %s168 = sshll.u32 %s167, 4
          %s169 = int_to_ptr.hbm [resolvable:$true] %s168
          %s170 = sshll.u32 %s162, 4
          %s171 = int_to_ptr.vmem [resolvable:$true] %s170
          %176 = dma.hbm_to_vmem [thread:$0]  %s169, 256, %s171, %s159, 128, 128, 8
        $region28: #{tpu_custom_call.1} parent=23 // pred_fallthru
          _
      $region24: #{tpu_custom_call.1} parent=5 // pred_fallthru
        _
      %p177 = scmp.le.s32.totalorder 1, %s14
      %p178 = scmp.lt.s32.totalorder %s14, 3
      %p179 = pnand %p177, %p178
      %p180 = pneg %p179
      // Predicated region
      $region29: #{tpu_custom_call.1} parent=5 // pred_check
        _
      $region30: #{tpu_custom_call.1} parent=5 // pred_check_branch
        %182 = sbr.rel (%p179) target = $region32
      $region31: #{tpu_custom_call.1} parent=5 // pred_region
        %s183 = ssub.s32 %s14, 1
        // Predicated region
        $region33: #{tpu_custom_call.1} parent=31 // pred_check
          %p184 = pneg %p35
        $region34: #{tpu_custom_call.1} parent=31 // pred_check_branch
          %186 = sbr.rel (%p184) target = $region36
        $region35: #{tpu_custom_call.1} parent=31 // pred_region
          %188 = dma.done [#allocation3], 256
        $region36: #{tpu_custom_call.1} parent=31 // pred_fallthru
          _
        // Predicated region
        $region37: #{tpu_custom_call.1} parent=31 // pred_check
          %p189 = pneg %p56
        $region38: #{tpu_custom_call.1} parent=31 // pred_check_branch
          %191 = sbr.rel (%p189) target = $region40
        $region39: #{tpu_custom_call.1} parent=31 // pred_region
          %193 = dma.done [#allocation6], 768
        $region40: #{tpu_custom_call.1} parent=31 // pred_fallthru
          _
        %s194 = sand.u32 %s19, 1
        %s195 = scalar_lea.sflag [#allocation3], %s194
        %s196 = sand.u32 %s69, 1
        %s197 = smul.addr %s196, 16
        %s198 = scalar_lea.vmem [#allocation7], %s197
        // Predicated region
        $region41: #{tpu_custom_call.1} parent=31 // pred_check
          %p199 = pneg %p82
        $region42: #{tpu_custom_call.1} parent=31 // pred_check_branch
          %201 = sbr.rel (%p199) target = $region44
        $region43: #{tpu_custom_call.1} parent=31 // pred_region
          %203 = dma.done %s195, 256
        $region44: #{tpu_custom_call.1} parent=31 // pred_fallthru
          _
        %p204 = pneg %p35
        %p205 = pneg %p32
        %p206 = pneg %p56
        %p207 = pneg %p53
        %s208 = sand.u32 %s19, 1
        %s209 = scalar_lea.sflag [#allocation3], %s208
        %s210 = sand.u32 %s69, 1
        %s211 = smul.addr %s210, 16
        %s212 = scalar_lea.vmem [#allocation7], %s211
        %p213 = pneg %p82
        %p214 = pneg %p79
        %p215 = pneg %p108
        %p216 = pneg %p105
        %s217 = sand.u32 %s95, 1
        %s218 = scalar_lea.sflag [#allocation4], %s217
        %s219 = sand.u32 %s95, 1
        %s220 = smul.addr %s219, 16
        %s221 = scalar_lea.vmem [#allocation8], %s220
        %v222 = vld [vmem:[%s198] sm:$0xff]
        %v223 = vld [vmem:[%s198 + $0x8] sm:$0xff]
        %v224 = vld [vmem:[#allocation2] sm:$0xff]
        %v225 = vld [vmem:[#allocation2 + $0x8] sm:$0xff]
        %vm226 = vcmask 130048
        %v228 = vsel %vm226, %v224, 0
        %v231 = vsel %vm226, %v225, 0
        %233 = vmatpush.msra.mxu0 0.0
        %234 = vmatpush.msra.mxu0 0.0
        %235 = vmatpush.msra.mxu0 0.0
        %236 = vmatpush.msra.mxu0 0.0
        %237 = vmatpush.msra.mxu0 0.0
        %238 = vmatpush.msra.mxu0 0.0
        %239 = vmatpush.msra.mxu0 0.0
        %240 = vmatpush.msra.mxu0 0.0
        %241 = vmatpush.msra.mxu0 0.0
        %242 = vmatpush.msra.mxu0 0.0
        %243 = vmatpush.msra.mxu0 0.0
        %244 = vmatpush.msra.mxu0 0.0
        %245 = vmatpush.msra.mxu0 0.0
        %246 = vmatpush.msra.mxu0 0.0
        %v247 = vand.u32 %v223, 4294901760
        %248 = vmatpush.msra.mxu0 %v247
        %v249 = vand.u32 %v222, 4294901760
        %250 = vmatpush.msra.mxu0 %v249
        %v251 = vand.u32 %v228, 4294901760
        %v252 = vsub.f32 %v228, %v251
        %v253 = vand.u32 %v252, 4294901760
        %v254 = vsub.f32 %v252, %v253
        %v255 = vand.u32 %v254, 4294901760
        %256 = vmatmul.f32.gmra.mxu0 %v255
        %v257 = vpop.f32.mrf.mxu0
        %v258 = vadd.f32 0.0, %v257
        %v259 = vand.u32 %v231, 4294901760
        %v260 = vsub.f32 %v231, %v259
        %v261 = vand.u32 %v260, 4294901760
        %v262 = vsub.f32 %v260, %v261
        %v263 = vand.u32 %v262, 4294901760
        %264 = vmatmul.f32.gmra.mxu0 %v263
        %v265 = vpop.f32.mrf.mxu0
        %v266 = vadd.f32 0.0, %v265
        %267 = vdwg.mxu0
        %268 = vmatpush.msra.mxu0 0.0
        %269 = vmatpush.msra.mxu0 0.0
        %270 = vmatpush.msra.mxu0 0.0
        %271 = vmatpush.msra.mxu0 0.0
        %272 = vmatpush.msra.mxu0 0.0
        %273 = vmatpush.msra.mxu0 0.0
        %274 = vmatpush.msra.mxu0 0.0
        %275 = vmatpush.msra.mxu0 0.0
        %276 = vmatpush.msra.mxu0 0.0
        %277 = vmatpush.msra.mxu0 0.0
        %278 = vmatpush.msra.mxu0 0.0
        %279 = vmatpush.msra.mxu0 0.0
        %280 = vmatpush.msra.mxu0 0.0
        %281 = vmatpush.msra.mxu0 0.0
        %v282 = vand.u32 %v223, 4294901760
        %v283 = vsub.f32 %v223, %v282
        %v284 = vand.u32 %v283, 4294901760
        %v285 = vsub.f32 %v283, %v284
        %v286 = vand.u32 %v285, 4294901760
        %287 = vmatpush.msra.mxu0 %v286
        %v288 = vand.u32 %v222, 4294901760
        %v289 = vsub.f32 %v222, %v288
        %v290 = vand.u32 %v289, 4294901760
        %v291 = vsub.f32 %v289, %v290
        %v292 = vand.u32 %v291, 4294901760
        %293 = vmatpush.msra.mxu0 %v292
        %v294 = vand.u32 %v228, 4294901760
        %295 = vmatmul.f32.gmra.mxu0 %v294
        %v296 = vpop.f32.mrf.mxu0
        %v297 = vadd.f32 %v258, %v296
        %v298 = vand.u32 %v231, 4294901760
        %299 = vmatmul.f32.gmra.mxu0 %v298
        %v300 = vpop.f32.mrf.mxu0
        %v301 = vadd.f32 %v266, %v300
        %302 = vdwg.mxu0
        %303 = vmatpush.msra.mxu0 0.0
        %304 = vmatpush.msra.mxu0 0.0
        %305 = vmatpush.msra.mxu0 0.0
        %306 = vmatpush.msra.mxu0 0.0
        %307 = vmatpush.msra.mxu0 0.0
        %308 = vmatpush.msra.mxu0 0.0
        %309 = vmatpush.msra.mxu0 0.0
        %310 = vmatpush.msra.mxu0 0.0
        %311 = vmatpush.msra.mxu0 0.0
        %312 = vmatpush.msra.mxu0 0.0
        %313 = vmatpush.msra.mxu0 0.0
        %314 = vmatpush.msra.mxu0 0.0
        %315 = vmatpush.msra.mxu0 0.0
        %316 = vmatpush.msra.mxu0 0.0
        %v317 = vand.u32 %v223, 4294901760
        %v318 = vsub.f32 %v223, %v317
        %319 = vmatpush.msra.mxu0 %v318
        %v320 = vand.u32 %v222, 4294901760
        %v321 = vsub.f32 %v222, %v320
        %322 = vmatpush.msra.mxu0 %v321
        %v323 = vand.u32 %v228, 4294901760
        %v324 = vsub.f32 %v228, %v323
        %325 = vmatmul.f32.gmra.mxu0 %v324
        %v326 = vpop.f32.mrf.mxu0
        %v327 = vadd.f32 %v297, %v326
        %v328 = vand.u32 %v231, 4294901760
        %v329 = vsub.f32 %v231, %v328
        %330 = vmatmul.f32.gmra.mxu0 %v329
        %v331 = vpop.f32.mrf.mxu0
        %v332 = vadd.f32 %v301, %v331
        %333 = vdwg.mxu0
        %334 = vmatpush.msra.mxu0 0.0
        %335 = vmatpush.msra.mxu0 0.0
        %336 = vmatpush.msra.mxu0 0.0
        %337 = vmatpush.msra.mxu0 0.0
        %338 = vmatpush.msra.mxu0 0.0
        %339 = vmatpush.msra.mxu0 0.0
        %340 = vmatpush.msra.mxu0 0.0
        %341 = vmatpush.msra.mxu0 0.0
        %342 = vmatpush.msra.mxu0 0.0
        %343 = vmatpush.msra.mxu0 0.0
        %344 = vmatpush.msra.mxu0 0.0
        %345 = vmatpush.msra.mxu0 0.0
        %346 = vmatpush.msra.mxu0 0.0
        %347 = vmatpush.msra.mxu0 0.0
        %v348 = vand.u32 %v223, 4294901760
        %349 = vmatpush.msra.mxu0 %v348
        %v350 = vand.u32 %v222, 4294901760
        %351 = vmatpush.msra.mxu0 %v350
        %v352 = vand.u32 %v228, 4294901760
        %v353 = vsub.f32 %v228, %v352
        %v354 = vand.u32 %v353, 4294901760
        %355 = vmatmul.f32.gmra.mxu0 %v354
        %v356 = vpop.f32.mrf.mxu0
        %v357 = vadd.f32 %v327, %v356
        %v358 = vand.u32 %v231, 4294901760
        %v359 = vsub.f32 %v231, %v358
        %v360 = vand.u32 %v359, 4294901760
        %361 = vmatmul.f32.gmra.mxu0 %v360
        %v362 = vpop.f32.mrf.mxu0
        %v363 = vadd.f32 %v332, %v362
        %364 = vdwg.mxu0
        %365 = vmatpush.msra.mxu0 0.0
        %366 = vmatpush.msra.mxu0 0.0
        %367 = vmatpush.msra.mxu0 0.0
        %368 = vmatpush.msra.mxu0 0.0
        %369 = vmatpush.msra.mxu0 0.0
        %370 = vmatpush.msra.mxu0 0.0
        %371 = vmatpush.msra.mxu0 0.0
        %372 = vmatpush.msra.mxu0 0.0
        %373 = vmatpush.msra.mxu0 0.0
        %374 = vmatpush.msra.mxu0 0.0
        %375 = vmatpush.msra.mxu0 0.0
        %376 = vmatpush.msra.mxu0 0.0
        %377 = vmatpush.msra.mxu0 0.0
        %378 = vmatpush.msra.mxu0 0.0
        %v379 = vand.u32 %v223, 4294901760
        %v380 = vsub.f32 %v223, %v379
        %v381 = vand.u32 %v380, 4294901760
        %382 = vmatpush.msra.mxu0 %v381
        %v383 = vand.u32 %v222, 4294901760
        %v384 = vsub.f32 %v222, %v383
        %v385 = vand.u32 %v384, 4294901760
        %386 = vmatpush.msra.mxu0 %v385
        %v387 = vand.u32 %v228, 4294901760
        %388 = vmatmul.f32.gmra.mxu0 %v387
        %v389 = vpop.f32.mrf.mxu0
        %v390 = vadd.f32 %v357, %v389
        %v391 = vand.u32 %v231, 4294901760
        %392 = vmatmul.f32.gmra.mxu0 %v391
        %v393 = vpop.f32.mrf.mxu0
        %v394 = vadd.f32 %v363, %v393
        %395 = vdwg.mxu0
        %396 = vmatpush.msra.mxu0 0.0
        %397 = vmatpush.msra.mxu0 0.0
        %398 = vmatpush.msra.mxu0 0.0
        %399 = vmatpush.msra.mxu0 0.0
        %400 = vmatpush.msra.mxu0 0.0
        %401 = vmatpush.msra.mxu0 0.0
        %402 = vmatpush.msra.mxu0 0.0
        %403 = vmatpush.msra.mxu0 0.0
        %404 = vmatpush.msra.mxu0 0.0
        %405 = vmatpush.msra.mxu0 0.0
        %406 = vmatpush.msra.mxu0 0.0
        %407 = vmatpush.msra.mxu0 0.0
        %408 = vmatpush.msra.mxu0 0.0
        %409 = vmatpush.msra.mxu0 0.0
        %v410 = vand.u32 %v223, 4294901760
        %411 = vmatpush.msra.mxu0 %v410
        %v412 = vand.u32 %v222, 4294901760
        %413 = vmatpush.msra.mxu0 %v412
        %v414 = vand.u32 %v228, 4294901760
        %415 = vmatmul.f32.gmra.mxu0 %v414
        %v416 = vpop.f32.mrf.mxu0
        %v417 = vadd.f32 %v390, %v416
        %v418 = vand.u32 %v231, 4294901760
        %419 = vmatmul.f32.gmra.mxu0 %v418
        %v420 = vpop.f32.mrf.mxu0
        %v421 = vadd.f32 %v394, %v420
        %422 = vdwg.mxu0
        %v423 = vld [vmem:[#allocation5] sm:$0xff]
        %v424 = vld [vmem:[#allocation5 + $0x8] sm:$0xff]
        %v425 = vld [vmem:[#allocation5 + $0x10] sm:$0xff]
        %v426 = vld [vmem:[#allocation5 + $0x18] sm:$0xff]
        %v427 = vld [vmem:[#allocation5 + $0x20] sm:$0xff]
        %v428 = vld [vmem:[#allocation5 + $0x28] sm:$0xff]
        %vm429 = vcmask 392192
        %v431 = vsel %vm429, %v417, 0
        %v434 = vsel %vm429, %v421, 0
        %436 = vmatpush.msra.mxu0 0.0
        %437 = vmatpush.msra.mxu0 0.0
        %438 = vmatpush.msra.mxu0 0.0
        %439 = vmatpush.msra.mxu0 0.0
        %440 = vmatpush.msra.mxu0 0.0
        %441 = vmatpush.msra.mxu0 0.0
        %442 = vmatpush.msra.mxu0 0.0
        %443 = vmatpush.msra.mxu0 0.0
        %444 = vmatpush.msra.mxu0 0.0
        %445 = vmatpush.msra.mxu0 0.0
        %v446 = vand.u32 %v428, 4294901760
        %447 = vmatpush.msra.mxu0 %v446
        %v448 = vand.u32 %v427, 4294901760
        %449 = vmatpush.msra.mxu0 %v448
        %v450 = vand.u32 %v426, 4294901760
        %451 = vmatpush.msra.mxu0 %v450
        %v452 = vand.u32 %v425, 4294901760
        %453 = vmatpush.msra.mxu0 %v452
        %v454 = vand.u32 %v424, 4294901760
        %455 = vmatpush.msra.mxu0 %v454
        %v456 = vand.u32 %v423, 4294901760
        %457 = vmatpush.msra.mxu0 %v456
        %v458 = vand.u32 %v431, 4294901760
        %v459 = vsub.f32 %v431, %v458
        %v460 = vand.u32 %v459, 4294901760
        %v461 = vsub.f32 %v459, %v460
        %v462 = vand.u32 %v461, 4294901760
        %463 = vmatmul.f32.gmra.mxu0 %v462
        %v464 = vpop.f32.mrf.mxu0
        %v465 = vadd.f32 0.0, %v464
        %v466 = vand.u32 %v434, 4294901760
        %v467 = vsub.f32 %v434, %v466
        %v468 = vand.u32 %v467, 4294901760
        %v469 = vsub.f32 %v467, %v468
        %v470 = vand.u32 %v469, 4294901760
        %471 = vmatmul.f32.gmra.mxu0 %v470
        %v472 = vpop.f32.mrf.mxu0
        %v473 = vadd.f32 0.0, %v472
        %474 = vdwg.mxu0
        %475 = vmatpush.msra.mxu0 0.0
        %476 = vmatpush.msra.mxu0 0.0
        %477 = vmatpush.msra.mxu0 0.0
        %478 = vmatpush.msra.mxu0 0.0
        %479 = vmatpush.msra.mxu0 0.0
        %480 = vmatpush.msra.mxu0 0.0
        %481 = vmatpush.msra.mxu0 0.0
        %482 = vmatpush.msra.mxu0 0.0
        %483 = vmatpush.msra.mxu0 0.0
        %484 = vmatpush.msra.mxu0 0.0
        %v485 = vand.u32 %v428, 4294901760
        %v486 = vsub.f32 %v428, %v485
        %v487 = vand.u32 %v486, 4294901760
        %v488 = vsub.f32 %v486, %v487
        %v489 = vand.u32 %v488, 4294901760
        %490 = vmatpush.msra.mxu0 %v489
        %v491 = vand.u32 %v427, 4294901760
        %v492 = vsub.f32 %v427, %v491
        %v493 = vand.u32 %v492, 4294901760
        %v494 = vsub.f32 %v492, %v493
        %v495 = vand.u32 %v494, 4294901760
        %496 = vmatpush.msra.mxu0 %v495
        %v497 = vand.u32 %v426, 4294901760
        %v498 = vsub.f32 %v426, %v497
        %v499 = vand.u32 %v498, 4294901760
        %v500 = vsub.f32 %v498, %v499
        %v501 = vand.u32 %v500, 4294901760
        %502 = vmatpush.msra.mxu0 %v501
        %v503 = vand.u32 %v425, 4294901760
        %v504 = vsub.f32 %v425, %v503
        %v505 = vand.u32 %v504, 4294901760
        %v506 = vsub.f32 %v504, %v505
        %v507 = vand.u32 %v506, 4294901760
        %508 = vmatpush.msra.mxu0 %v507
        %v509 = vand.u32 %v424, 4294901760
        %v510 = vsub.f32 %v424, %v509
        %v511 = vand.u32 %v510, 4294901760
        %v512 = vsub.f32 %v510, %v511
        %v513 = vand.u32 %v512, 4294901760
        %514 = vmatpush.msra.mxu0 %v513
        %v515 = vand.u32 %v423, 4294901760
        %v516 = vsub.f32 %v423, %v515
        %v517 = vand.u32 %v516, 4294901760
        %v518 = vsub.f32 %v516, %v517
        %v519 = vand.u32 %v518, 4294901760
        %520 = vmatpush.msra.mxu0 %v519
        %v521 = vand.u32 %v431, 4294901760
        %522 = vmatmul.f32.gmra.mxu0 %v521
        %v523 = vpop.f32.mrf.mxu0
        %v524 = vadd.f32 %v465, %v523
        %v525 = vand.u32 %v434, 4294901760
        %526 = vmatmul.f32.gmra.mxu0 %v525
        %v527 = vpop.f32.mrf.mxu0
        %v528 = vadd.f32 %v473, %v527
        %529 = vdwg.mxu0
        %530 = vmatpush.msra.mxu0 0.0
        %531 = vmatpush.msra.mxu0 0.0
        %532 = vmatpush.msra.mxu0 0.0
        %533 = vmatpush.msra.mxu0 0.0
        %534 = vmatpush.msra.mxu0 0.0
        %535 = vmatpush.msra.mxu0 0.0
        %536 = vmatpush.msra.mxu0 0.0
        %537 = vmatpush.msra.mxu0 0.0
        %538 = vmatpush.msra.mxu0 0.0
        %539 = vmatpush.msra.mxu0 0.0
        %v540 = vand.u32 %v428, 4294901760
        %v541 = vsub.f32 %v428, %v540
        %542 = vmatpush.msra.mxu0 %v541
        %v543 = vand.u32 %v427, 4294901760
        %v544 = vsub.f32 %v427, %v543
        %545 = vmatpush.msra.mxu0 %v544
        %v546 = vand.u32 %v426, 4294901760
        %v547 = vsub.f32 %v426, %v546
        %548 = vmatpush.msra.mxu0 %v547
        %v549 = vand.u32 %v425, 4294901760
        %v550 = vsub.f32 %v425, %v549
        %551 = vmatpush.msra.mxu0 %v550
        %v552 = vand.u32 %v424, 4294901760
        %v553 = vsub.f32 %v424, %v552
        %554 = vmatpush.msra.mxu0 %v553
        %v555 = vand.u32 %v423, 4294901760
        %v556 = vsub.f32 %v423, %v555
        %557 = vmatpush.msra.mxu0 %v556
        %v558 = vand.u32 %v431, 4294901760
        %v559 = vsub.f32 %v431, %v558
        %560 = vmatmul.f32.gmra.mxu0 %v559
        %v561 = vpop.f32.mrf.mxu0
        %v562 = vadd.f32 %v524, %v561
        %v563 = vand.u32 %v434, 4294901760
        %v564 = vsub.f32 %v434, %v563
        %565 = vmatmul.f32.gmra.mxu0 %v564
        %v566 = vpop.f32.mrf.mxu0
        %v567 = vadd.f32 %v528, %v566
        %568 = vdwg.mxu0
        %569 = vmatpush.msra.mxu0 0.0
        %570 = vmatpush.msra.mxu0 0.0
        %571 = vmatpush.msra.mxu0 0.0
        %572 = vmatpush.msra.mxu0 0.0
        %573 = vmatpush.msra.mxu0 0.0
        %574 = vmatpush.msra.mxu0 0.0
        %575 = vmatpush.msra.mxu0 0.0
        %576 = vmatpush.msra.mxu0 0.0
        %577 = vmatpush.msra.mxu0 0.0
        %578 = vmatpush.msra.mxu0 0.0
        %v579 = vand.u32 %v428, 4294901760
        %580 = vmatpush.msra.mxu0 %v579
        %v581 = vand.u32 %v427, 4294901760
        %582 = vmatpush.msra.mxu0 %v581
        %v583 = vand.u32 %v426, 4294901760
        %584 = vmatpush.msra.mxu0 %v583
        %v585 = vand.u32 %v425, 4294901760
        %586 = vmatpush.msra.mxu0 %v585
        %v587 = vand.u32 %v424, 4294901760
        %588 = vmatpush.msra.mxu0 %v587
        %v589 = vand.u32 %v423, 4294901760
        %590 = vmatpush.msra.mxu0 %v589
        %v591 = vand.u32 %v431, 4294901760
        %v592 = vsub.f32 %v431, %v591
        %v593 = vand.u32 %v592, 4294901760
        %594 = vmatmul.f32.gmra.mxu0 %v593
        %v595 = vpop.f32.mrf.mxu0
        %v596 = vadd.f32 %v562, %v595
        %v597 = vand.u32 %v434, 4294901760
        %v598 = vsub.f32 %v434, %v597
        %v599 = vand.u32 %v598, 4294901760
        %600 = vmatmul.f32.gmra.mxu0 %v599
        %v601 = vpop.f32.mrf.mxu0
        %v602 = vadd.f32 %v567, %v601
        %603 = vdwg.mxu0
        %604 = vmatpush.msra.mxu0 0.0
        %605 = vmatpush.msra.mxu0 0.0
        %606 = vmatpush.msra.mxu0 0.0
        %607 = vmatpush.msra.mxu0 0.0
        %608 = vmatpush.msra.mxu0 0.0
        %609 = vmatpush.msra.mxu0 0.0
        %610 = vmatpush.msra.mxu0 0.0
        %611 = vmatpush.msra.mxu0 0.0
        %612 = vmatpush.msra.mxu0 0.0
        %613 = vmatpush.msra.mxu0 0.0
        %v614 = vand.u32 %v428, 4294901760
        %v615 = vsub.f32 %v428, %v614
        %v616 = vand.u32 %v615, 4294901760
        %617 = vmatpush.msra.mxu0 %v616
        %v618 = vand.u32 %v427, 4294901760
        %v619 = vsub.f32 %v427, %v618
        %v620 = vand.u32 %v619, 4294901760
        %621 = vmatpush.msra.mxu0 %v620
        %v622 = vand.u32 %v426, 4294901760
        %v623 = vsub.f32 %v426, %v622
        %v624 = vand.u32 %v623, 4294901760
        %625 = vmatpush.msra.mxu0 %v624
        %v626 = vand.u32 %v425, 4294901760
        %v627 = vsub.f32 %v425, %v626
        %v628 = vand.u32 %v627, 4294901760
        %629 = vmatpush.msra.mxu0 %v628
        %v630 = vand.u32 %v424, 4294901760
        %v631 = vsub.f32 %v424, %v630
        %v632 = vand.u32 %v631, 4294901760
        %633 = vmatpush.msra.mxu0 %v632
        %v634 = vand.u32 %v423, 4294901760
        %v635 = vsub.f32 %v423, %v634
        %v636 = vand.u32 %v635, 4294901760
        %637 = vmatpush.msra.mxu0 %v636
        %v638 = vand.u32 %v431, 4294901760
        %639 = vmatmul.f32.gmra.mxu0 %v638
        %v640 = vpop.f32.mrf.mxu0
        %v641 = vadd.f32 %v596, %v640
        %v642 = vand.u32 %v434, 4294901760
        %643 = vmatmul.f32.gmra.mxu0 %v642
        %v644 = vpop.f32.mrf.mxu0
        %v645 = vadd.f32 %v602, %v644
        %646 = vdwg.mxu0
        %647 = vmatpush.msra.mxu0 0.0
        %648 = vmatpush.msra.mxu0 0.0
        %649 = vmatpush.msra.mxu0 0.0
        %650 = vmatpush.msra.mxu0 0.0
        %651 = vmatpush.msra.mxu0 0.0
        %652 = vmatpush.msra.mxu0 0.0
        %653 = vmatpush.msra.mxu0 0.0
        %654 = vmatpush.msra.mxu0 0.0
        %655 = vmatpush.msra.mxu0 0.0
        %656 = vmatpush.msra.mxu0 0.0
        %v657 = vand.u32 %v428, 4294901760
        %658 = vmatpush.msra.mxu0 %v657
        %v659 = vand.u32 %v427, 4294901760
        %660 = vmatpush.msra.mxu0 %v659
        %v661 = vand.u32 %v426, 4294901760
        %662 = vmatpush.msra.mxu0 %v661
        %v663 = vand.u32 %v425, 4294901760
        %664 = vmatpush.msra.mxu0 %v663
        %v665 = vand.u32 %v424, 4294901760
        %666 = vmatpush.msra.mxu0 %v665
        %v667 = vand.u32 %v423, 4294901760
        %668 = vmatpush.msra.mxu0 %v667
        %v669 = vand.u32 %v431, 4294901760
        %670 = vmatmul.f32.gmra.mxu0 %v669
        %v671 = vpop.f32.mrf.mxu0
        %v672 = vadd.f32 %v641, %v671
        %v673 = vand.u32 %v434, 4294901760
        %674 = vmatmul.f32.gmra.mxu0 %v673
        %v675 = vpop.f32.mrf.mxu0
        %v676 = vadd.f32 %v645, %v675
        %677 = vdwg.mxu0
        %678 = vst.msk [vmem:[%s221] sm:$0xff] %vm429, %v672
        %679 = vst.msk [vmem:[%s221 + $0x8] sm:$0xff] %vm429, %v676
        %s680 = sand.u32 %s95, 1
        %s681 = scalar_lea.sflag [#allocation4], %s680
        %s682 = sand.u32 %s95, 1
        %s683 = smul.addr %s682, 16
        %s684 = scalar_lea.vmem [#allocation8], %s683
        // Predicated region
        $region45: #{tpu_custom_call.1} parent=31 // pred_check
          %p685 = pneg %p105
        $region46: #{tpu_custom_call.1} parent=31 // pred_check_branch
          %687 = sbr.rel (%p685) target = $region48
        $region47: #{tpu_custom_call.1} parent=31 // pred_region
          %689 = vsyncadd %s681, 0
          %s690 = smul.addr %s19, 2
          %s691 = smul.addr %s690, 8
          %s692 = scalar_lea.hbm %s3, %s691
          %s693 = sshll.u32 %s684, 4
          %s694 = int_to_ptr.vmem [resolvable:$true] %s693
          %s695 = sshll.u32 %s692, 4
          %s696 = int_to_ptr.hbm [resolvable:$true] %s695
          %701 = dma.vmem_to_hbm [thread:$0]  %s694, 256, %s696, %s681, 128, 128, 8
        $region48: #{tpu_custom_call.1} parent=31 // pred_fallthru
          _
      $region32: #{tpu_custom_call.1} parent=5 // pred_fallthru
        _
      %p702 = scmp.le.s32.totalorder 2, %s14
      // Predicated region
      $region49: #{tpu_custom_call.1} parent=5 // pred_check
        %p703 = pneg %p702
      $region50: #{tpu_custom_call.1} parent=5 // pred_check_branch
        %705 = sbr.rel (%p703) target = $region52
      $region51: #{tpu_custom_call.1} parent=5 // pred_region
        %s706 = ssub.s32 %s14, 2
        // Predicated region
        $region53: #{tpu_custom_call.1} parent=51 // pred_check
          %p707 = pneg %p111
        $region54: #{tpu_custom_call.1} parent=51 // pred_check_branch
          %709 = sbr.rel (%p707) target = $region56
        $region55: #{tpu_custom_call.1} parent=51 // pred_region
          %s710 = sand.u32 %s96, 1
          %s711 = scalar_lea.sflag [#allocation4], %s710
          %s712 = sand.u32 %s96, 1
          %s713 = smul.addr %s712, 16
          %s714 = scalar_lea.vmem [#allocation8], %s713
          %716 = dma.done %s711, 256
        $region56: #{tpu_custom_call.1} parent=51 // pred_fallthru
          _
      $region52: #{tpu_custom_call.1} parent=5 // pred_fallthru
        _
    $region6: #{tpu_custom_call.1} parent=1 // loop_footer
      %s18 = sadd.s32 1, %s14
    $region7: #{tpu_custom_call.1} parent=1 // loop_footer_branch
      %13 = sbr.rel target = $region3
    $region8: #{tpu_custom_call.1} parent=1 // loop_exit
      _
    %717 = vsyncpa [#allocation3], 1
    %s718 = scalar_lea.sflag [#allocation3], 1
    %719 = vsyncpa %s718, 1
    %720 = vsyncpa [#allocation6], 1
    %721 = vsyncpa [#allocation4], 1
    %s722 = scalar_lea.sflag [#allocation4], 1
    %723 = vsyncpa %s722, 1

</llo_original>
